<compile_context>
chip_gen: v5e
topology: v5e:2x2
jax: 0.10.0
libtpu: 0.0.40
codegen_flags: <defaults>
</compile_context>

<pallas_src>
import functools

import jax
import jax.numpy as jnp
from jax import lax
from jax.experimental import pallas as pl
from jax.experimental.pallas import tpu as pltpu


def _round_up(x, m):
    return ((x + m - 1) // m) * m


def _score_kernel(z_ref, w1_ref, b1_ref, w2_ref, beta_ref, hsum_ref, *,
                  n_nodes, n_meta, in_size, tile_n, ragged):
    """Pass 1: accumulate per-metapath sum_n tanh(z W1 + b1); finalize beta."""
    i = pl.program_id(0)

    @pl.when(i == 0)
    def _init():
        hsum_ref[...] = jnp.zeros_like(hsum_ref)

    w1 = w1_ref[...]                                   # (D, H)
    b1 = b1_ref[...]                                   # (1, H)

    if ragged:
        # Rows past the end of z in the last tile hold unspecified data: mask
        # them out of the node-axis reduction (rows are independent, so they
        # cannot pollute valid rows through the matmul).
        valid = n_nodes - i * tile_n
        row_ids = lax.broadcasted_iota(jnp.int32, (tile_n, 1), 0)
        row_mask = row_ids < valid

    partial = []
    for m in range(n_meta):                            # static, small unroll
        zm = z_ref[:, pl.ds(m * in_size, in_size)]     # (TILE_N, D) lane-aligned view
        h = jnp.tanh(jnp.dot(zm, w1, preferred_element_type=jnp.float32) + b1)
        if ragged:
            h = jnp.where(row_mask, h, 0.0)
        # reduce over nodes first (XLU sublane reduce); dot with w2 once at end
        partial.append(jnp.sum(h, axis=0, keepdims=True))
    # one accumulator update per tile (no per-row read-modify-write)
    hsum_ref[...] = hsum_ref[...] + jnp.concatenate(partial, axis=0)

    @pl.when(i == pl.num_programs(0) - 1)
    def _finalize():
        # mean_n (h @ w2) == (sum_n h) @ w2 / N  (w2 passed as a (1, H) row).
        w = jnp.sum(hsum_ref[...] * w2_ref[...], axis=1, keepdims=True) * (
            1.0 / n_nodes)                             # (M, 1)
        e = jnp.exp(w - jnp.max(w))
        beta_ref[...] = e / jnp.sum(e)                 # softmax over meta-paths


def _weighted_sum_kernel(beta_ref, z_ref, out_ref, *, n_meta, in_size):
    """Pass 2: out = sum_m beta[m] * z[:, m, :] for one node tile."""
    acc = beta_ref[0] * z_ref[:, pl.ds(0, in_size)]
    for m in range(1, n_meta):
        acc = acc + beta_ref[m] * z_ref[:, pl.ds(m * in_size, in_size)]
    out_ref[...] = acc.astype(out_ref.dtype)


def semantic_attention(z, w1, b1, w2, *, tile_n=None):
    """z: (N, M, D) f32.  w1: (D, H), b1: (H,), w2: (H,)  (PyTorch weights pre-transposed)."""
    N, M, D = z.shape
    H = w1.shape[1]

    if tile_n is None:
        # target ~4 MiB of z per grid step (double-buffered by the pipeline)
        tile_n = max(8, (4 * 1024 * 1024) // max(1, M * D * 4))
    tile_n = max(8, _round_up(min(tile_n, _round_up(N, 8)), 8))
    num_tiles = pl.cdiv(N, tile_n)
    ragged = (N % tile_n) != 0

    # contiguous reshape: free (metadata only), no HBM transpose / pad pass
    z2 = z.reshape(N, M * D)

    w1f = w1.astype(jnp.float32)
    b1r = b1.reshape(1, H).astype(jnp.float32)
    w2r = w2.reshape(1, H).astype(jnp.float32)

    vmem_limit = 32 * 1024 * 1024  # safe on v5e/v6e/v7x, above tile footprint

    # ---------------- pass 1: per-metapath scores -> beta (M, 1) --------------
    score_kernel = functools.partial(
        _score_kernel, n_nodes=N, n_meta=M, in_size=D, tile_n=tile_n,
        ragged=ragged)
    beta = pl.pallas_call(
        score_kernel,
        out_shape=jax.ShapeDtypeStruct((M, 1), jnp.float32),
        grid=(num_tiles,),
        in_specs=[
            pl.BlockSpec((tile_n, M * D), lambda i: (i, 0)),   # z tile (streamed)
            pl.BlockSpec((D, H), lambda i: (0, 0)),            # W1 resident
            pl.BlockSpec((1, H), lambda i: (0, 0)),            # b1 resident
            pl.BlockSpec((1, H), lambda i: (0, 0)),            # w2 resident
        ],
        out_specs=pl.BlockSpec((M, 1), lambda i: (0, 0)),      # resident, written last step
        scratch_shapes=[pltpu.VMEM((M, H), jnp.float32)],
        compiler_params=pltpu.CompilerParams(
            dimension_semantics=("arbitrary",),                # node axis is a reduction
            vmem_limit_bytes=vmem_limit),
        cost_estimate=pl.CostEstimate(
            flops=2 * M * N * D * H,
            transcendentals=M * N * H,
            bytes_accessed=4 * (N * M * D + D * H + 2 * H + M)),
    )(z2, w1f, b1r, w2r)

    # ---------------- pass 2: out = sum_m beta[m] * z[:, m, :] ----------------
    wsum_kernel = functools.partial(_weighted_sum_kernel, n_meta=M, in_size=D)
    out = pl.pallas_call(
        wsum_kernel,
        out_shape=jax.ShapeDtypeStruct((N, D), jnp.float32),   # no pad, no post-slice
        grid=(num_tiles,),
        in_specs=[
            pl.BlockSpec(memory_space=pltpu.MemorySpace.SMEM), # beta scalars
            pl.BlockSpec((tile_n, M * D), lambda i: (i, 0)),   # z tile
        ],
        out_specs=pl.BlockSpec((tile_n, D), lambda i: (i, 0)), # lane-dense when D%128==0
        compiler_params=pltpu.CompilerParams(
            dimension_semantics=("parallel",),                 # megacore-shardable
            vmem_limit_bytes=vmem_limit),
        cost_estimate=pl.CostEstimate(
            flops=2 * M * N * D,
            transcendentals=0,
            bytes_accessed=4 * (N * M * D + N * D + M)),
    )(beta.reshape(M), z2)

    return out


def semantic_attention_ref(z, w1, b1, w2):
    # pure-JAX reference mirroring the PyTorch module
    s = jnp.tanh(jnp.einsum("nmd,dh->nmh", z, w1) + b1)        # (N, M, H)
    s = jnp.einsum("nmh,h->nm", s, w2)[..., None]              # (N, M, 1)
    w = s.mean(0)                                              # (M, 1)
    beta = jax.nn.softmax(w, axis=0)                           # (M, 1)
    return (beta[None, :, :] * z).sum(1)                       # (N, D)


if __name__ == "__main__":
    key = jax.random.PRNGKey(0)
    # nodes, meta-paths, in_size, hidden_size (module default hidden=128)
    N, M, D, H = 44, 4, 128, 128

    kz, k1, kb, k2 = jax.random.split(key, 4)
    z = jax.random.normal(kz, (N, M, D), jnp.float32)
    # PyTorch shapes: W1 (H,D), b1 (H,), W2 (1,H); stored pre-transposed here
    w1 = 0.1 * jax.random.normal(k1, (D, H), jnp.float32)
    b1 = 0.1 * jax.random.normal(kb, (H,), jnp.float32)
    w2 = 0.1 * jax.random.normal(k2, (H,), jnp.float32)

    # tile_n=16 -> 3 node tiles with a ragged (12-row) last tile: exercises the
    # multi-tile accumulation, the in-kernel boundary masking, and both grid
    # axes' semantics, all without any host-side padding of z.
    out = semantic_attention(z, w1, b1, w2, tile_n=16)
    jax.block_until_ready(out)

    expected = semantic_attention_ref(z, w1, b1, w2)
    assert out.shape == (N, D)
    max_err = jnp.max(jnp.abs(out - expected))
    assert jnp.allclose(out, expected, atol=1e-4, rtol=1e-4), f"max err {max_err}"
    print("KERNEL_OK")
</pallas_src>

<mosaic_0001>
module attributes {stable_mosaic.version = 11 : i64} {
  func.func @_score_kernel(%arg0: i32, %arg1: memref<16x512xf32, #tpu.memory_space<vmem>>, %arg2: memref<128x128xf32, #tpu.memory_space<vmem>>, %arg3: memref<1x128xf32, #tpu.memory_space<vmem>>, %arg4: memref<1x128xf32, #tpu.memory_space<vmem>>, %arg5: memref<4x1xf32, #tpu.memory_space<vmem>>, %arg6: memref<4x128xf32, #tpu.memory_space<vmem>>) attributes {dimension_semantics = [#tpu.dimension_semantics<arbitrary>], iteration_bounds = array<i64: 3>, scalar_prefetch = 0 : i64, scratch_operands = 1 : i64, tpu.core_type = #tpu.core_type<tc>, window_params = [{transform_indices = @transform_0, window_bounds = array<i64: 16, 512>}, {pipeline_mode = #tpu.pipeline_mode<synchronous>, transform_indices = @transform_1, window_bounds = array<i64: 128, 128>}, {pipeline_mode = #tpu.pipeline_mode<synchronous>, transform_indices = @transform_2, window_bounds = array<i64: 1, 128>}, {pipeline_mode = #tpu.pipeline_mode<synchronous>, transform_indices = @transform_3, window_bounds = array<i64: 1, 128>}, {pipeline_mode = #tpu.pipeline_mode<synchronous>, transform_indices = @transform_4, window_bounds = array<i64: 4, 1>}]} {
    %c0_i32 = arith.constant 0 : i32
    %0 = arith.cmpi eq, %arg0, %c0_i32 : i32
    %1 = arith.extui %0 : i1 to i32
    %c0_i32_0 = arith.constant 0 : i32
    %2 = arith.cmpi ne, %1, %c0_i32_0 : i32
    scf.if %2 {
      %cst_25 = arith.constant 0.000000e+00 : f32
      %61 = vector.broadcast %cst_25 : f32 to vector<4x128xf32>
      %c0_26 = arith.constant 0 : index
      %c0_27 = arith.constant 0 : index
      %62 = vector.load %arg6[%c0_26, %c0_27] : memref<4x128xf32, #tpu.memory_space<vmem>>, vector<4x128xf32>
      tpu.vector_store %arg6[%c0_26, %c0_27], %61 {strides = array<i32>} : memref<4x128xf32, #tpu.memory_space<vmem>>, vector<4x128xf32>,
    } else {
    }
    %c0 = arith.constant 0 : index
    %c0_1 = arith.constant 0 : index
    %3 = vector.load %arg2[%c0, %c0_1] : memref<128x128xf32, #tpu.memory_space<vmem>>, vector<128x128xf32>
    %c0_2 = arith.constant 0 : index
    %c0_3 = arith.constant 0 : index
    %4 = vector.load %arg3[%c0_2, %c0_3] : memref<1x128xf32, #tpu.memory_space<vmem>>, vector<1x128xf32>
    %c16_i32 = arith.constant 16 : i32
    %5 = arith.muli %arg0, %c16_i32 : i32
    %c44_i32 = arith.constant 44 : i32
    %6 = arith.subi %c44_i32, %5 : i32
    %7 = tpu.iota {dimensions = array<i32: 0>} : vector<16x1xi32>
    %8 = vector.broadcast %6 : i32 to vector<16x1xi32>
    %9 = arith.cmpi slt, %7, %8 : vector<16x1xi32>
    %c0_4 = arith.constant 0 : index
    %c0_5 = arith.constant 0 : index
    %10 = vector.load %arg1[%c0_4, %c0_5] : memref<16x512xf32, #tpu.memory_space<vmem>>, vector<16x128xf32>
    %cst = arith.constant dense<0.000000e+00> : vector<16x128xf32>
    %11 = tpu.matmul %10, %3, %cst {dimension_numbers = #tpu.dot_dimension_numbers<[1], [0], [0], [1], [0, 0, 1, 1], [], []>} : vector<16x128xf32>, vector<128x128xf32>, vector<16x128xf32> -> vector<16x128xf32>
    %12 = vector.broadcast %4 : vector<1x128xf32> to vector<16x128xf32>
    %13 = arith.addf %11, %12 : vector<16x128xf32>
    %14 = math.tanh %13 : vector<16x128xf32>
    %cst_6 = arith.constant 0.000000e+00 : f32
    %15 = vector.shape_cast %9 : vector<16x1xi1> to vector<16x1xi1>
    %16 = vector.broadcast %15 : vector<16x1xi1> to vector<16x128xi1>
    %17 = vector.broadcast %cst_6 : f32 to vector<16x128xf32>
    %18 = arith.select %16, %14, %17 : vector<16x128xi1>, vector<16x128xf32>
    %cst_7 = arith.constant dense<0.000000e+00> : vector<128xf32>
    %19 = vector.multi_reduction <add>, %18, %cst_7 [0] : vector<16x128xf32> to vector<128xf32>
    %20 = vector.shape_cast %19 : vector<128xf32> to vector<1x128xf32>
    %c0_8 = arith.constant 0 : index
    %c128 = arith.constant 128 : index
    %21 = vector.load %arg1[%c0_8, %c128] : memref<16x512xf32, #tpu.memory_space<vmem>>, vector<16x128xf32>
    %cst_9 = arith.constant dense<0.000000e+00> : vector<16x128xf32>
    %22 = tpu.matmul %21, %3, %cst_9 {dimension_numbers = #tpu.dot_dimension_numbers<[1], [0], [0], [1], [0, 0, 1, 1], [], []>} : vector<16x128xf32>, vector<128x128xf32>, vector<16x128xf32> -> vector<16x128xf32>
    %23 = vector.broadcast %4 : vector<1x128xf32> to vector<16x128xf32>
    %24 = arith.addf %22, %23 : vector<16x128xf32>
    %25 = math.tanh %24 : vector<16x128xf32>
    %cst_10 = arith.constant 0.000000e+00 : f32
    %26 = vector.shape_cast %9 : vector<16x1xi1> to vector<16x1xi1>
    %27 = vector.broadcast %26 : vector<16x1xi1> to vector<16x128xi1>
    %28 = vector.broadcast %cst_10 : f32 to vector<16x128xf32>
    %29 = arith.select %27, %25, %28 : vector<16x128xi1>, vector<16x128xf32>
    %cst_11 = arith.constant dense<0.000000e+00> : vector<128xf32>
    %30 = vector.multi_reduction <add>, %29, %cst_11 [0] : vector<16x128xf32> to vector<128xf32>
    %31 = vector.shape_cast %30 : vector<128xf32> to vector<1x128xf32>
    %c0_12 = arith.constant 0 : index
    %c256 = arith.constant 256 : index
    %32 = vector.load %arg1[%c0_12, %c256] : memref<16x512xf32, #tpu.memory_space<vmem>>, vector<16x128xf32>
    %cst_13 = arith.constant dense<0.000000e+00> : vector<16x128xf32>
    %33 = tpu.matmul %32, %3, %cst_13 {dimension_numbers = #tpu.dot_dimension_numbers<[1], [0], [0], [1], [0, 0, 1, 1], [], []>} : vector<16x128xf32>, vector<128x128xf32>, vector<16x128xf32> -> vector<16x128xf32>
    %34 = vector.broadcast %4 : vector<1x128xf32> to vector<16x128xf32>
    %35 = arith.addf %33, %34 : vector<16x128xf32>
    %36 = math.tanh %35 : vector<16x128xf32>
    %cst_14 = arith.constant 0.000000e+00 : f32
    %37 = vector.shape_cast %9 : vector<16x1xi1> to vector<16x1xi1>
    %38 = vector.broadcast %37 : vector<16x1xi1> to vector<16x128xi1>
    %39 = vector.broadcast %cst_14 : f32 to vector<16x128xf32>
    %40 = arith.select %38, %36, %39 : vector<16x128xi1>, vector<16x128xf32>
    %cst_15 = arith.constant dense<0.000000e+00> : vector<128xf32>
    %41 = vector.multi_reduction <add>, %40, %cst_15 [0] : vector<16x128xf32> to vector<128xf32>
    %42 = vector.shape_cast %41 : vector<128xf32> to vector<1x128xf32>
    %c0_16 = arith.constant 0 : index
    %c384 = arith.constant 384 : index
    %43 = vector.load %arg1[%c0_16, %c384] : memref<16x512xf32, #tpu.memory_space<vmem>>, vector<16x128xf32>
    %cst_17 = arith.constant dense<0.000000e+00> : vector<16x128xf32>
    %44 = tpu.matmul %43, %3, %cst_17 {dimension_numbers = #tpu.dot_dimension_numbers<[1], [0], [0], [1], [0, 0, 1, 1], [], []>} : vector<16x128xf32>, vector<128x128xf32>, vector<16x128xf32> -> vector<16x128xf32>
    %45 = vector.broadcast %4 : vector<1x128xf32> to vector<16x128xf32>
    %46 = arith.addf %44, %45 : vector<16x128xf32>
    %47 = math.tanh %46 : vector<16x128xf32>
    %cst_18 = arith.constant 0.000000e+00 : f32
    %48 = vector.shape_cast %9 : vector<16x1xi1> to vector<16x1xi1>
    %49 = vector.broadcast %48 : vector<16x1xi1> to vector<16x128xi1>
    %50 = vector.broadcast %cst_18 : f32 to vector<16x128xf32>
    %51 = arith.select %49, %47, %50 : vector<16x128xi1>, vector<16x128xf32>
    %cst_19 = arith.constant dense<0.000000e+00> : vector<128xf32>
    %52 = vector.multi_reduction <add>, %51, %cst_19 [0] : vector<16x128xf32> to vector<128xf32>
    %53 = vector.shape_cast %52 : vector<128xf32> to vector<1x128xf32>
    %c0_20 = arith.constant 0 : index
    %c0_21 = arith.constant 0 : index
    %54 = vector.load %arg6[%c0_20, %c0_21] : memref<4x128xf32, #tpu.memory_space<vmem>>, vector<4x128xf32>
    %55 = tpu.concatenate %20, %31, %42, %53 in 0 : vector<1x128xf32>, vector<1x128xf32>, vector<1x128xf32>, vector<1x128xf32> -> vector<4x128xf32>
    %56 = arith.addf %54, %55 : vector<4x128xf32>
    %c0_22 = arith.constant 0 : index
    %c0_23 = arith.constant 0 : index
    %57 = vector.load %arg6[%c0_22, %c0_23] : memref<4x128xf32, #tpu.memory_space<vmem>>, vector<4x128xf32>
    tpu.vector_store %arg6[%c0_22, %c0_23], %56 {strides = array<i32>} : memref<4x128xf32, #tpu.memory_space<vmem>>, vector<4x128xf32>,
    %c2_i32 = arith.constant 2 : i32
    %58 = arith.cmpi eq, %arg0, %c2_i32 : i32
    %59 = arith.extui %58 : i1 to i32
    %c0_i32_24 = arith.constant 0 : i32
    %60 = arith.cmpi ne, %59, %c0_i32_24 : i32
    scf.if %60 {
      %c0_25 = arith.constant 0 : index
      %c0_26 = arith.constant 0 : index
      %61 = vector.load %arg6[%c0_25, %c0_26] : memref<4x128xf32, #tpu.memory_space<vmem>>, vector<4x128xf32>
      %c0_27 = arith.constant 0 : index
      %c0_28 = arith.constant 0 : index
      %62 = vector.load %arg4[%c0_27, %c0_28] : memref<1x128xf32, #tpu.memory_space<vmem>>, vector<1x128xf32>
      %63 = vector.broadcast %62 : vector<1x128xf32> to vector<4x128xf32>
      %64 = arith.mulf %61, %63 : vector<4x128xf32>
      %cst_29 = arith.constant dense<0.000000e+00> : vector<4xf32>
      %65 = vector.multi_reduction <add>, %64, %cst_29 [1] : vector<4x128xf32> to vector<4xf32>
      %66 = vector.shape_cast %65 : vector<4xf32> to vector<4x1xf32>
      %cst_30 = arith.constant 0.0227272734 : f32
      %67 = vector.broadcast %cst_30 : f32 to vector<4x1xf32>
      %68 = arith.mulf %66, %67 : vector<4x1xf32>
      %69 = vector.shape_cast %68 : vector<4x1xf32> to vector<1x4x1xf32>
      %cst_31 = arith.constant dense<0xFF800000> : vector<1xf32>
      %70 = vector.multi_reduction <maximumf>, %69, %cst_31 [1, 2] : vector<1x4x1xf32> to vector<1xf32>
      %71 = vector.shape_cast %70 : vector<1xf32> to vector<1x1x1xf32>
      %72 = vector.extract %71[0, 0, 0] : f32 from vector<1x1x1xf32>
      %73 = vector.broadcast %72 : f32 to vector<4x1xf32>
      %74 = arith.subf %68, %73 : vector<4x1xf32>
      %75 = math.exp %74 : vector<4x1xf32>
      %76 = vector.shape_cast %75 : vector<4x1xf32> to vector<1x4x1xf32>
      %cst_32 = arith.constant dense<0.000000e+00> : vector<1xf32>
      %77 = vector.multi_reduction <add>, %76, %cst_32 [1, 2] : vector<1x4x1xf32> to vector<1xf32>
      %78 = vector.shape_cast %77 : vector<1xf32> to vector<1x1x1xf32>
      %79 = vector.extract %78[0, 0, 0] : f32 from vector<1x1x1xf32>
      %80 = vector.broadcast %79 : f32 to vector<4x1xf32>
      %81 = arith.divf %75, %80 : vector<4x1xf32>
      %c0_33 = arith.constant 0 : index
      %c0_34 = arith.constant 0 : index
      %82 = vector.load %arg5[%c0_33, %c0_34] : memref<4x1xf32, #tpu.memory_space<vmem>>, vector<4x1xf32>
      tpu.vector_store %arg5[%c0_33, %c0_34], %81 {strides = array<i32>} : memref<4x1xf32, #tpu.memory_space<vmem>>, vector<4x1xf32>,
    } else {
    }
    return
  }
  func.func @transform_0(%arg0: i32) -> (i32, i32) {
    %c0_i32 = arith.constant 0 : i32
    %c0_i32_0 = arith.constant 0 : i32
    return %arg0, %c0_i32 : i32, i32
  }
  func.func @transform_1(%arg0: i32) -> (i32, i32) {
    %c0_i32 = arith.constant 0 : i32
    %c0_i32_0 = arith.constant 0 : i32
    %c0_i32_1 = arith.constant 0 : i32
    return %c0_i32, %c0_i32_0 : i32, i32
  }
  func.func @transform_2(%arg0: i32) -> (i32, i32) {
    %c0_i32 = arith.constant 0 : i32
    %c0_i32_0 = arith.constant 0 : i32
    %c0_i32_1 = arith.constant 0 : i32
    return %c0_i32, %c0_i32_0 : i32, i32
  }
  func.func @transform_3(%arg0: i32) -> (i32, i32) {
    %c0_i32 = arith.constant 0 : i32
    %c0_i32_0 = arith.constant 0 : i32
    %c0_i32_1 = arith.constant 0 : i32
    return %c0_i32, %c0_i32_0 : i32, i32
  }
  func.func @transform_4(%arg0: i32) -> (i32, i32) {
    %c0_i32 = arith.constant 0 : i32
    %c0_i32_0 = arith.constant 0 : i32
    %c0_i32_1 = arith.constant 0 : i32
    return %c0_i32, %c0_i32_0 : i32, i32
  }
}

</mosaic_0001>

<llo_original>
// kernel: tpu_custom_call.1
$region0: #{tpu_custom_call.1}
  #allocation0 [shape = 'u32[]', space=smem, size = 0x4, offset = 0x4, fixed_abs, tag = 'smem constant byte address 0x4 - core index']
  #allocation1 [shape = 'u32[72,128]{1,0:T(1,128)}', space=vmem, size = 0x9000, scoped, tag = 'internal scratch']
  #allocation2 [shape = 'f32[4,128]{1,0:T(4,128)}', space=vmem, size = 0x800, scoped, tag = 'scratch operand']
  %s0 = inlined_call_operand.hbm [shape: f32[44,512], index: 0, kind: input, shape index: {}]
  %s1 = inlined_call_operand.hbm [shape: f32[128,128], index: 1, kind: input, shape index: {}]
  %s2 = inlined_call_operand.vmem [shape: f32[1,128], index: 2, kind: input, shape index: {}]
  %s3 = inlined_call_operand.vmem [shape: f32[1,128], index: 3, kind: input, shape index: {}]
  %s4 = inlined_call_operand.vmem [shape: f32[4,1], index: 4, kind: output, shape index: {}]
  %s5 = sld [smem:[#allocation0]]
  $region65: #{tpu_custom_call.1} parent=0
    _
  %s7 = ssub.s32 1, %s5
  %s8 = scalar_select 0, %s7, %s5
  $region1: #{tpu_custom_call.1} parent=0
    #allocation3 [shape = 'u8[65536]{0}', space=vmem, size = 0x10000, scoped, tag = 'input window, operand 0']
    #allocation4 [shape = 's32[2]{0}', space=sflag, size = 0x8, scoped, tag = 'scoped memory for tpu_custom_call.1']
    #allocation5 [shape = 'u8[65536]{0}', space=vmem, size = 0x10000, scoped, tag = 'input window, operand 1, single buffered']
    #allocation6 [shape = 's32[1]{0}', space=sflag, size = 0x4, scoped, tag = 'scoped memory for tpu_custom_call.1']
    %9 = vsyncpa [#allocation4], 0
    %s10 = scalar_lea.sflag [#allocation4], 1
    %11 = vsyncpa %s10, 0
    %12 = vsyncpa [#allocation6], 0
    loop: start=0, step=1, limit=5
    $region2: #{tpu_custom_call.1} parent=1 // loop_pre_header
      _
    $region3: #{tpu_custom_call.1} parent=1 // loop_header
      %s14 = sphi 0, %s18
      %p15 = scmp.ge.s32.totalorder %s14, 5
      %s24 = sphi 0, %s26
      %s27 = sphi 0, %s24
      %s28 = sphi 0, %s27
      %s44 = sphi 0, %s28
      %s48 = sphi 0, %s48
      %s50 = sphi 0, %s48
      %s51 = sphi 0, %s50
      %s65 = sphi 0, %s51
      %s69 = sphi 0, %s69
      %s71 = sphi 0, %s69
      %s72 = sphi 0, %s71
      %s86 = sphi 0, %s72
      %s90 = sphi 0, %s90
      %s92 = sphi 0, %s90
      %s93 = sphi 0, %s92
      %s107 = sphi 0, %s93
      %s111 = sphi 0, %s111
      %s113 = sphi 0, %s111
      %s114 = sphi 0, %s113
      %s128 = sphi 0, %s114
    $region4: #{tpu_custom_call.1} parent=1 // loop_header_branch
      %17 = sbr.rel (%p15) target = $region8
    $region5: #{tpu_custom_call.1} parent=1 // loop_body
      %s19 = ssub.s32 %s14, 1
      %s20 = ssub.s32 %s14, 2
      %s21 = sadd.s32 %s14, 1
      %s22 = ssub.s32 %s14, %s21
      %p23 = scmp.eq.s32.totalorder %s22, 0
      %s25 = sadd.s32 %s24, 1
      %s26 = scalar_select %p23, %s24, %s25
      %p29 = pneg %p23
      %p30 = scmp.eq.s32.totalorder %s14, 2
      %p31 = por %p29, %p30
      %p32 = scmp.ne.s32.totalorder %s24, %s27
      %p33 = scmp.eq.s32.totalorder %s14, 0
      %p34 = por %p32, %p33
      %p35 = scmp.ne.s32.totalorder %s24, %s27
      %p36 = scmp.eq.s32.totalorder %s19, 2
      %p37 = por %p35, %p36
      %p38 = scmp.ne.s32.totalorder %s27, %s28
      %p39 = scmp.eq.s32.totalorder %s19, 0
      %p40 = por %p38, %p39
      %p41 = scmp.ne.s32.totalorder %s27, %s28
      %p42 = scmp.eq.s32.totalorder %s20, 2
      %p43 = por %p41, %p42
      %p45 = scmp.ne.s32.totalorder %s28, %s44
      %p46 = scmp.eq.s32.totalorder %s20, 0
      %p47 = por %p45, %p46
      %s49 = sadd.s32 %s48, 1
      %p52 = scmp.eq.s32.totalorder %s14, 2
      %p53 = scmp.ne.s32.totalorder %s48, %s50
      %p54 = scmp.eq.s32.totalorder %s14, 0
      %p55 = por %p53, %p54
      %p56 = scmp.ne.s32.totalorder %s48, %s50
      %p57 = scmp.eq.s32.totalorder %s19, 2
      %p58 = por %p56, %p57
      %p59 = scmp.ne.s32.totalorder %s50, %s51
      %p60 = scmp.eq.s32.totalorder %s19, 0
      %p61 = por %p59, %p60
      %p62 = scmp.ne.s32.totalorder %s50, %s51
      %p63 = scmp.eq.s32.totalorder %s20, 2
      %p64 = por %p62, %p63
      %p66 = scmp.ne.s32.totalorder %s51, %s65
      %p67 = scmp.eq.s32.totalorder %s20, 0
      %p68 = por %p66, %p67
      %s70 = sadd.s32 %s69, 1
      %p73 = scmp.eq.s32.totalorder %s14, 2
      %p74 = scmp.ne.s32.totalorder %s69, %s71
      %p75 = scmp.eq.s32.totalorder %s14, 0
      %p76 = por %p74, %p75
      %p77 = scmp.ne.s32.totalorder %s69, %s71
      %p78 = scmp.eq.s32.totalorder %s19, 2
      %p79 = por %p77, %p78
      %p80 = scmp.ne.s32.totalorder %s71, %s72
      %p81 = scmp.eq.s32.totalorder %s19, 0
      %p82 = por %p80, %p81
      %p83 = scmp.ne.s32.totalorder %s71, %s72
      %p84 = scmp.eq.s32.totalorder %s20, 2
      %p85 = por %p83, %p84
      %p87 = scmp.ne.s32.totalorder %s72, %s86
      %p88 = scmp.eq.s32.totalorder %s20, 0
      %p89 = por %p87, %p88
      %s91 = sadd.s32 %s90, 1
      %p94 = scmp.eq.s32.totalorder %s14, 2
      %p95 = scmp.ne.s32.totalorder %s90, %s92
      %p96 = scmp.eq.s32.totalorder %s14, 0
      %p97 = por %p95, %p96
      %p98 = scmp.ne.s32.totalorder %s90, %s92
      %p99 = scmp.eq.s32.totalorder %s19, 2
      %p100 = por %p98, %p99
      %p101 = scmp.ne.s32.totalorder %s92, %s93
      %p102 = scmp.eq.s32.totalorder %s19, 0
      %p103 = por %p101, %p102
      %p104 = scmp.ne.s32.totalorder %s92, %s93
      %p105 = scmp.eq.s32.totalorder %s20, 2
      %p106 = por %p104, %p105
      %p108 = scmp.ne.s32.totalorder %s93, %s107
      %p109 = scmp.eq.s32.totalorder %s20, 0
      %p110 = por %p108, %p109
      %s112 = sadd.s32 %s111, 1
      %p115 = scmp.eq.s32.totalorder %s14, 2
      %p116 = scmp.ne.s32.totalorder %s111, %s113
      %p117 = scmp.eq.s32.totalorder %s14, 0
      %p118 = por %p116, %p117
      %p119 = scmp.ne.s32.totalorder %s111, %s113
      %p120 = scmp.eq.s32.totalorder %s19, 2
      %p121 = por %p119, %p120
      %p122 = scmp.ne.s32.totalorder %s113, %s114
      %p123 = scmp.eq.s32.totalorder %s19, 0
      %p124 = por %p122, %p123
      %p125 = scmp.ne.s32.totalorder %s113, %s114
      %p126 = scmp.eq.s32.totalorder %s20, 2
      %p127 = por %p125, %p126
      %p129 = scmp.ne.s32.totalorder %s114, %s128
      %p130 = scmp.eq.s32.totalorder %s20, 0
      %p131 = por %p129, %p130
      %p132 = scmp.le.s32.totalorder 1, %s14
      %p133 = scmp.lt.s32.totalorder %s14, 4
      %p134 = pnand %p132, %p133
      %p135 = pneg %p134
      // Predicated region
      $region9: #{tpu_custom_call.1} parent=5 // pred_check
        _
      $region10: #{tpu_custom_call.1} parent=5 // pred_check_branch
        %137 = sbr.rel (%p134) target = $region12
      $region11: #{tpu_custom_call.1} parent=5 // pred_region
        %s138 = ssub.s32 %s14, 1
        // Predicated region
        $region13: #{tpu_custom_call.1} parent=11 // pred_check
          %p139 = pneg %p61
        $region14: #{tpu_custom_call.1} parent=11 // pred_check_branch
          %141 = sbr.rel (%p139) target = $region16
        $region15: #{tpu_custom_call.1} parent=11 // pred_region
          %143 = vsyncadd [#allocation6], 0
          %s144 = sshll.u32 %s1, 4
          %s145 = int_to_ptr.hbm [resolvable:$true] %s144
          %s146 = sshll.u32 [#allocation5], 4
          %s147 = int_to_ptr.vmem [resolvable:$true] %s146
          %152 = dma.hbm_to_vmem [thread:$0]  %s145, 2048, %s147, [#allocation6], 128, 128, 8
        $region16: #{tpu_custom_call.1} parent=11 // pred_fallthru
          _
        // Predicated region
        $region17: #{tpu_custom_call.1} parent=11 // pred_check
          %p153 = pneg %p82
        $region18: #{tpu_custom_call.1} parent=11 // pred_check_branch
          %155 = sbr.rel (%p153) target = $region20
        $region19: #{tpu_custom_call.1} parent=11 // pred_region
          _
        $region20: #{tpu_custom_call.1} parent=11 // pred_fallthru
          _
        // Predicated region
        $region21: #{tpu_custom_call.1} parent=11 // pred_check
          %p156 = pneg %p103
        $region22: #{tpu_custom_call.1} parent=11 // pred_check_branch
          %158 = sbr.rel (%p156) target = $region24
        $region23: #{tpu_custom_call.1} parent=11 // pred_region
          _
        $region24: #{tpu_custom_call.1} parent=11 // pred_fallthru
          _
      $region12: #{tpu_custom_call.1} parent=5 // pred_fallthru
        _
      %p159 = scmp.lt.s32.totalorder %s14, 3
      // Predicated region
      $region25: #{tpu_custom_call.1} parent=5 // pred_check
        %p160 = pneg %p159
      $region26: #{tpu_custom_call.1} parent=5 // pred_check_branch
        %162 = sbr.rel (%p160) target = $region28
      $region27: #{tpu_custom_call.1} parent=5 // pred_region
        // Predicated region
        $region29: #{tpu_custom_call.1} parent=27 // pred_check
          %p163 = pneg %p34
        $region30: #{tpu_custom_call.1} parent=27 // pred_check_branch
          %165 = sbr.rel (%p163) target = $region32
        $region31: #{tpu_custom_call.1} parent=27 // pred_region
          %s166 = sand.u32 %s24, 1
          %s167 = scalar_lea.sflag [#allocation4], %s166
          %s168 = sand.u32 %s24, 1
          %s169 = smul.addr %s168, 64
          %s170 = scalar_lea.vmem [#allocation3], %s169
          %s171 = smul.u32 2, %s14
          %173 = vsyncadd %s167, 0
          %s174 = smul.addr %s171, 4
          %s175 = smul.addr %s174, 8
          %s176 = scalar_lea.hbm %s0, %s175
          %s177 = sshll.u32 %s176, 4
          %s178 = int_to_ptr.hbm [resolvable:$true] %s177
          %s179 = sshll.u32 %s170, 4
          %s180 = int_to_ptr.vmem [resolvable:$true] %s179
          %185 = dma.hbm_to_vmem [thread:$0]  %s178, 1024, %s180, %s167, 512, 512, 32
        $region32: #{tpu_custom_call.1} parent=27 // pred_fallthru
          _
      $region28: #{tpu_custom_call.1} parent=5 // pred_fallthru
        _
      %p186 = scmp.le.s32.totalorder 1, %s14
      %p187 = scmp.lt.s32.totalorder %s14, 4
      %p188 = pnand %p186, %p187
      %p189 = pneg %p188
      // Predicated region
      $region33: #{tpu_custom_call.1} parent=5 // pred_check
        _
      $region34: #{tpu_custom_call.1} parent=5 // pred_check_branch
        %191 = sbr.rel (%p188) target = $region36
      $region35: #{tpu_custom_call.1} parent=5 // pred_region
        %s192 = ssub.s32 %s14, 1
        %s193 = sand.u32 %s27, 1
        %s194 = scalar_lea.sflag [#allocation4], %s193
        %s195 = sand.u32 %s27, 1
        %s196 = smul.addr %s195, 64
        %s197 = scalar_lea.vmem [#allocation3], %s196
        // Predicated region
        $region37: #{tpu_custom_call.1} parent=35 // pred_check
          %p198 = pneg %p40
        $region38: #{tpu_custom_call.1} parent=35 // pred_check_branch
          %200 = sbr.rel (%p198) target = $region40
        $region39: #{tpu_custom_call.1} parent=35 // pred_region
          %202 = dma.done %s194, 1024
        $region40: #{tpu_custom_call.1} parent=35 // pred_fallthru
          _
        // Predicated region
        $region41: #{tpu_custom_call.1} parent=35 // pred_check
          %p203 = pneg %p61
        $region42: #{tpu_custom_call.1} parent=35 // pred_check_branch
          %205 = sbr.rel (%p203) target = $region44
        $region43: #{tpu_custom_call.1} parent=35 // pred_region
          %207 = dma.done [#allocation6], 2048
        $region44: #{tpu_custom_call.1} parent=35 // pred_fallthru
          _
        %s208 = sand.u32 %s27, 1
        %s209 = scalar_lea.sflag [#allocation4], %s208
        %s210 = sand.u32 %s27, 1
        %s211 = smul.addr %s210, 64
        %s212 = scalar_lea.vmem [#allocation3], %s211
        %p213 = pneg %p40
        %p214 = pneg %p37
        %p215 = pneg %p61
        %p216 = pneg %p58
        %p217 = pneg %p82
        %p218 = pneg %p79
        %p219 = pneg %p103
        %p220 = pneg %p100
        %p221 = pneg %p124
        %p222 = pneg %p121
        %s223 = smul.u32 2, %s19
        %p224 = scmp.eq.s32.totalorder %s19, 0
        // Predicated region
        $region45: #{tpu_custom_call.1} parent=35 // pred_check
          %p225 = pneg %p224
        $region46: #{tpu_custom_call.1} parent=35 // pred_check_branch
          %227 = sbr.rel (%p225) target = $region48
        $region47: #{tpu_custom_call.1} parent=35 // pred_region
          %228 = vst [vmem:[#allocation2] sm:$0xf] 0.0
        $region48: #{tpu_custom_call.1} parent=35 // pred_fallthru
          _
        %v229 = vld [vmem:[#allocation5] sm:$0xff]
        %v230 = vld [vmem:[#allocation5 + $0x8] sm:$0xff]
        %v231 = vld [vmem:[#allocation5 + $0x10] sm:$0xff]
        %v232 = vld [vmem:[#allocation5 + $0x18] sm:$0xff]
        %v233 = vld [vmem:[#allocation5 + $0x20] sm:$0xff]
        %v234 = vld [vmem:[#allocation5 + $0x28] sm:$0xff]
        %v235 = vld [vmem:[#allocation5 + $0x30] sm:$0xff]
        %v236 = vld [vmem:[#allocation5 + $0x38] sm:$0xff]
        %v237 = vld [vmem:[#allocation5 + $0x40] sm:$0xff]
        %v238 = vld [vmem:[#allocation5 + $0x48] sm:$0xff]
        %v239 = vld [vmem:[#allocation5 + $0x50] sm:$0xff]
        %v240 = vld [vmem:[#allocation5 + $0x58] sm:$0xff]
        %v241 = vld [vmem:[#allocation5 + $0x60] sm:$0xff]
        %v242 = vld [vmem:[#allocation5 + $0x68] sm:$0xff]
        %v243 = vld [vmem:[#allocation5 + $0x70] sm:$0xff]
        %v244 = vld [vmem:[#allocation5 + $0x78] sm:$0xff]
        %v245 = vld [vmem:[%s2] sm:$0x1]
        %s246 = smul.u32 %s19, 16
        %s247 = ssub.s32 44, %s246
        %v248 = vlaneseq
        %v249 = vshrl.u32 %v248, 7
        %v250 = vadd.s32 %v249, 8
        %v251 = vstv %s247
        %vm252 = vcmp.lt.s32.totalorder %v249, %v251
        %vm253 = vcmp.lt.s32.totalorder %v250, %v251
        %v254 = vld [vmem:[%s197] sm:$0xff]
        %v255 = vld [vmem:[%s197 + $0x20] sm:$0xff]
        %v257 = vperm.slane %v245, 0
        %259 = vmatpush.msra.mxu0 %v244
        %260 = vmatpush.msra.mxu0 %v243
        %261 = vmatpush.msra.mxu0 %v242
        %262 = vmatpush.msra.mxu0 %v241
        %263 = vmatpush.msra.mxu0 %v240
        %264 = vmatpush.msra.mxu0 %v239
        %265 = vmatpush.msra.mxu0 %v238
        %266 = vmatpush.msra.mxu0 %v237
        %267 = vmatpush.msra.mxu0 %v236
        %268 = vmatpush.msra.mxu0 %v235
        %269 = vmatpush.msra.mxu0 %v234
        %270 = vmatpush.msra.mxu0 %v233
        %271 = vmatpush.msra.mxu0 %v232
        %272 = vmatpush.msra.mxu0 %v231
        %273 = vmatpush.msra.mxu0 %v230
        %274 = vmatpush.msra.mxu0 %v229
        %275 = vmatmul.f32.gmra.mxu0 %v254
        %v276 = vpop.f32.mrf.mxu0
        %v277 = vadd.f32 %v257, %v276
        %278 = vmatmul.f32.gmra.mxu0 %v255
        %v279 = vpop.f32.mrf.mxu0
        %v280 = vadd.f32 %v257, %v279
        %281 = vdwg.mxu0
        %v282 = vtanh.pop %v277
        %v283 = vtanh.pop %v280
        %v284 = vsel %vm252, 1, 0
        %v285 = vsel %vm253, 1, 0
        %vm286 = vcmp.eq.s32.totalorder %v284, 1
        %vm287 = vcmp.eq.s32.totalorder %v285, 1
        %v288 = vsel %vm286, %v282, 0.0
        %v289 = vsel %vm287, %v283, 0.0
        %v290 = vadd.f32 %v288, %v289
        %v291 = vrot.slane %v290, 4
        %v292 = vadd.f32 %v290, %v291
        %v293 = vrot.slane %v292, 2
        %v294 = vadd.f32 %v292, %v293
        %v295 = vrot.slane %v294, 1
        %v296 = vadd.f32 %v294, %v295
        %v297 = vld [vmem:[%s197 + $0x8] sm:$0xff]
        %v298 = vld [vmem:[%s197 + $0x28] sm:$0xff]
        %299 = vmatpush.msra.mxu0 %v244
        %300 = vmatpush.msra.mxu0 %v243
        %301 = vmatpush.msra.mxu0 %v242
        %302 = vmatpush.msra.mxu0 %v241
        %303 = vmatpush.msra.mxu0 %v240
        %304 = vmatpush.msra.mxu0 %v239
        %305 = vmatpush.msra.mxu0 %v238
        %306 = vmatpush.msra.mxu0 %v237
        %307 = vmatpush.msra.mxu0 %v236
        %308 = vmatpush.msra.mxu0 %v235
        %309 = vmatpush.msra.mxu0 %v234
        %310 = vmatpush.msra.mxu0 %v233
        %311 = vmatpush.msra.mxu0 %v232
        %312 = vmatpush.msra.mxu0 %v231
        %313 = vmatpush.msra.mxu0 %v230
        %314 = vmatpush.msra.mxu0 %v229
        %315 = vmatmul.f32.gmra.mxu0 %v297
        %v316 = vpop.f32.mrf.mxu0
        %v317 = vadd.f32 %v257, %v316
        %318 = vmatmul.f32.gmra.mxu0 %v298
        %v319 = vpop.f32.mrf.mxu0
        %v320 = vadd.f32 %v257, %v319
        %321 = vdwg.mxu0
        %v322 = vtanh.pop %v317
        %v323 = vtanh.pop %v320
        %v324 = vsel %vm286, %v322, 0.0
        %v325 = vsel %vm287, %v323, 0.0
        %v326 = vadd.f32 %v324, %v325
        %v327 = vrot.slane %v326, 4
        %v328 = vadd.f32 %v326, %v327
        %v329 = vrot.slane %v328, 2
        %v330 = vadd.f32 %v328, %v329
        %v331 = vrot.slane %v330, 1
        %v332 = vadd.f32 %v330, %v331
        %v333 = vld [vmem:[%s197 + $0x10] sm:$0xff]
        %v334 = vld [vmem:[%s197 + $0x30] sm:$0xff]
        %335 = vmatpush.msra.mxu0 %v244
        %336 = vmatpush.msra.mxu0 %v243
        %337 = vmatpush.msra.mxu0 %v242
        %338 = vmatpush.msra.mxu0 %v241
        %339 = vmatpush.msra.mxu0 %v240
        %340 = vmatpush.msra.mxu0 %v239
        %341 = vmatpush.msra.mxu0 %v238
        %342 = vmatpush.msra.mxu0 %v237
        %343 = vmatpush.msra.mxu0 %v236
        %344 = vmatpush.msra.mxu0 %v235
        %345 = vmatpush.msra.mxu0 %v234
        %346 = vmatpush.msra.mxu0 %v233
        %347 = vmatpush.msra.mxu0 %v232
        %348 = vmatpush.msra.mxu0 %v231
        %349 = vmatpush.msra.mxu0 %v230
        %350 = vmatpush.msra.mxu0 %v229
        %351 = vmatmul.f32.gmra.mxu0 %v333
        %v352 = vpop.f32.mrf.mxu0
        %v353 = vadd.f32 %v257, %v352
        %354 = vmatmul.f32.gmra.mxu0 %v334
        %v355 = vpop.f32.mrf.mxu0
        %v356 = vadd.f32 %v257, %v355
        %357 = vdwg.mxu0
        %v358 = vtanh.pop %v353
        %v359 = vtanh.pop %v356
        %v360 = vsel %vm286, %v358, 0.0
        %v361 = vsel %vm287, %v359, 0.0
        %v362 = vadd.f32 %v360, %v361
        %v363 = vrot.slane %v362, 4
        %v364 = vadd.f32 %v362, %v363
        %v365 = vrot.slane %v364, 2
        %v366 = vadd.f32 %v364, %v365
        %v367 = vrot.slane %v366, 1
        %v368 = vadd.f32 %v366, %v367
        %v369 = vld [vmem:[%s197 + $0x18] sm:$0xff]
        %v370 = vld [vmem:[%s197 + $0x38] sm:$0xff]
        %371 = vmatpush.msra.mxu0 %v244
        %372 = vmatpush.msra.mxu0 %v243
        %373 = vmatpush.msra.mxu0 %v242
        %374 = vmatpush.msra.mxu0 %v241
        %375 = vmatpush.msra.mxu0 %v240
        %376 = vmatpush.msra.mxu0 %v239
        %377 = vmatpush.msra.mxu0 %v238
        %378 = vmatpush.msra.mxu0 %v237
        %379 = vmatpush.msra.mxu0 %v236
        %380 = vmatpush.msra.mxu0 %v235
        %381 = vmatpush.msra.mxu0 %v234
        %382 = vmatpush.msra.mxu0 %v233
        %383 = vmatpush.msra.mxu0 %v232
        %384 = vmatpush.msra.mxu0 %v231
        %385 = vmatpush.msra.mxu0 %v230
        %386 = vmatpush.msra.mxu0 %v229
        %387 = vmatmul.f32.gmra.mxu0 %v369
        %v388 = vpop.f32.mrf.mxu0
        %v389 = vadd.f32 %v257, %v388
        %390 = vmatmul.f32.gmra.mxu0 %v370
        %v391 = vpop.f32.mrf.mxu0
        %v392 = vadd.f32 %v257, %v391
        %393 = vdwg.mxu0
        %v394 = vtanh.pop %v389
        %v395 = vtanh.pop %v392
        %v396 = vsel %vm286, %v394, 0.0
        %v397 = vsel %vm287, %v395, 0.0
        %v398 = vadd.f32 %v396, %v397
        %v399 = vrot.slane %v398, 4
        %v400 = vadd.f32 %v398, %v399
        %v401 = vrot.slane %v400, 2
        %v402 = vadd.f32 %v400, %v401
        %v403 = vrot.slane %v402, 1
        %v404 = vadd.f32 %v402, %v403
        %v405 = vld [vmem:[#allocation2] sm:$0xf]
        %vm406 = vcmask 1040384
        %v407 = vsel %vm406, %v296, %v332
        %vm408 = vcmask 1041408
        %v409 = vsel %vm408, %v407, %v368
        %vm410 = vcmask 1042432
        %v411 = vsel %vm410, %v409, %v404
        %v412 = vadd.f32 %v405, %v411
        %413 = vst [vmem:[#allocation2] sm:$0xf] %v412
        %p414 = scmp.eq.s32.totalorder %s19, 2
        // Predicated region
        $region49: #{tpu_custom_call.1} parent=35 // pred_check
          %p415 = pneg %p414
        $region50: #{tpu_custom_call.1} parent=35 // pred_check_branch
          %417 = sbr.rel (%p415) target = $region52
        $region51: #{tpu_custom_call.1} parent=35 // pred_region
          %v418 = vld [vmem:[#allocation2] sm:$0xf]
          %v419 = vld [vmem:[%s3] sm:$0x1]
          %v421 = vperm.slane %v419, 0
          %v423 = vmul.f32 %v418, %v421
          %vm424 = vcmask 1043456
          %v425 = vsel %vm424, %v423, 0.0
          %426 = vadd.xlane.f32.xlu0 %v425
          %v427 = vpop.xlane.xlu0 %426
          %v428 = vmul.f32 %v427, 0.022727273
          %v429 = vsel %vm424, %v428, -inf
          %v430 = vrot.slane %v429, 4
          %v431 = vmax.f32 %v429, %v430
          %v432 = vrot.slane %v431, 2
          %v433 = vmax.f32 %v431, %v432
          %v434 = vrot.slane %v433, 1
          %v435 = vmax.f32 %v433, %v434
          %s436 = vtos %v435
          %v437 = vstv %s436
          %v438 = vsub.f32 %v428, %v437
          %v439 = vmul.f32 %v438, 1.442695
          %v440 = vpow.pop %v439
          %vm441 = vcmask 3072
          %v442 = vsel %vm441, %v440, 0.0
          %443 = vadd.xlane.f32.xlu0 %v442
          %v444 = vpop.xlane.xlu0 %443
          %v445 = vrot.slane %v444, 4
          %v446 = vadd.f32 %v444, %v445
          %v447 = vrot.slane %v446, 2
          %v448 = vadd.f32 %v446, %v447
          %v449 = vrot.slane %v448, 1
          %v450 = vadd.f32 %v448, %v449
          %s451 = vtos %v450
          %v452 = vstv %s451
          %v453 = vrcp.pop %v452
          %v454 = vmul.f32 %v452, %v453
          %v455 = vsub.f32 1.0, %v454
          %v456 = vmul.f32 %v453, %v455
          %v457 = vadd.f32 %v453, %v456
          %vm458 = vweird.f32 %v452
          %vm459 = vweird.f32 %v453
          %vm460 = vmor %vm458, %vm459
          %v461 = vsel %vm460, %v453, %v457
          %v462 = vand.u32 2147483647, %v452
          %vm463 = vcmp.eq.f32.partialorder %v462, 8.507059e+37
          %v464 = vand.u32 %v452, 2147483648
          %v465 = vor.u32 1.1754944e-38, %v464
          %v466 = vsel %vm463, %v465, %v461
          %v467 = vmul.f32 %v440, %v466
          %468 = vst.msk [vmem:[%s4] sm:$0xf] %vm441, %v467
        $region52: #{tpu_custom_call.1} parent=35 // pred_fallthru
          _
        // Predicated region
        $region53: #{tpu_custom_call.1} parent=35 // pred_check
          %p469 = pneg %p121
        $region54: #{tpu_custom_call.1} parent=35 // pred_check_branch
          %471 = sbr.rel (%p469) target = $region56
        $region55: #{tpu_custom_call.1} parent=35 // pred_region
          _
        $region56: #{tpu_custom_call.1} parent=35 // pred_fallthru
          _
        // Predicated region
        $region57: #{tpu_custom_call.1} parent=35 // pred_check
          %p472 = pneg %p121
        $region58: #{tpu_custom_call.1} parent=35 // pred_check_branch
          %474 = sbr.rel (%p472) target = $region60
        $region59: #{tpu_custom_call.1} parent=35 // pred_region
          _
        $region60: #{tpu_custom_call.1} parent=35 // pred_fallthru
          _
      $region36: #{tpu_custom_call.1} parent=5 // pred_fallthru
        _
      %p475 = scmp.le.s32.totalorder 2, %s14
      // Predicated region
      $region61: #{tpu_custom_call.1} parent=5 // pred_check
        %p476 = pneg %p475
      $region62: #{tpu_custom_call.1} parent=5 // pred_check_branch
        %478 = sbr.rel (%p476) target = $region64
      $region63: #{tpu_custom_call.1} parent=5 // pred_region
        %s479 = ssub.s32 %s14, 2
      $region64: #{tpu_custom_call.1} parent=5 // pred_fallthru
        _
    $region6: #{tpu_custom_call.1} parent=1 // loop_footer
      %s18 = sadd.s32 1, %s14
    $region7: #{tpu_custom_call.1} parent=1 // loop_footer_branch
      %13 = sbr.rel target = $region3
    $region8: #{tpu_custom_call.1} parent=1 // loop_exit
      _
    %480 = vsyncpa [#allocation4], 1
    %s481 = scalar_lea.sflag [#allocation4], 1
    %482 = vsyncpa %s481, 1
    %483 = vsyncpa [#allocation6], 1

</llo_original>
